<compile_context>
chip_gen: v6e
topology: v6e:2x2x1
jax: 0.10.0
libtpu: 0.0.40
codegen_flags: <defaults>
</compile_context>

<pallas_src>
import math
from functools import partial

import jax
import jax.numpy as jnp
from jax.experimental import pallas as pl
from jax.experimental.pallas import tpu as pltpu


KH = 3    # frequency taps of the Conv2d kernel
KW = 3    # causal time taps (self.K in the reference module)
LANE = 128


# ----------------------------- Pallas kernels --------------------------------

def _embed_gemm_kernel(p_ref, w_ref, b_ref, o_ref):
    """One lane-dense GEMM tile for Embed_Causal's Conv2d.

    p_ref: (Kc, tn)   im2col patches, Kc = KH*KW*Din on sublanes, bf16
    w_ref: (Dout, Kc) flattened conv weights, bf16
    b_ref: (Dout, 1)  bias, f32
    o_ref: (Dout, tn) lane-dense output tile, f32
    """
    acc = jax.lax.dot_general(
        w_ref[...], p_ref[...],
        dimension_numbers=(((1,), (0,)), ((), ())),   # (Dout,Kc) @ (Kc,tn)
        preferred_element_type=jnp.float32)
    o_ref[...] = (acc + b_ref[...]).astype(o_ref.dtype)


def _embed_gemm_delay_kernel(p_ref, w_ref, b_ref, o_ref, e_ref, *,
                             t_len, delay, tile_n):
    """Same GEMM + fused delay epilogue: e[..., t] = out[..., t-delay], t>=delay else 0."""
    acc = jax.lax.dot_general(
        w_ref[...], p_ref[...],
        dimension_numbers=(((1,), (0,)), ((), ())),
        preferred_element_type=jnp.float32)
    out = acc + b_ref[...]
    o_ref[...] = out.astype(o_ref.dtype)

    # Lane-axis rotate (XLU slot, ~free next to the MXU/VPU).  The roll wraps
    # across (b, f) blocks only at columns with t < delay, which the mask zeros.
    col = pl.program_id(0) * tile_n + jax.lax.broadcasted_iota(
        jnp.int32, out.shape, 1)
    keep = (col % t_len) >= delay
    rolled = pltpu.roll(out, shift=delay, axis=1)
    e_ref[...] = jnp.where(keep, rolled, 0.0).astype(e_ref.dtype)


# ------------------------------ kernel wrapper --------------------------------

def _pick_tile_n(n_pad, max_tile=2048):
    """Largest multiple of 128 that divides n_pad and is <= max_tile."""
    if n_pad <= max_tile:
        return n_pad
    t = (max_tile // LANE) * LANE
    while t >= LANE:
        if n_pad % t == 0:
            return t
        t -= LANE
    return n_pad


def embed_causal_conv(patches, w_t, bias, *, t_len, delay):
    """patches: (Kc, N) bf16 with N flattened (b, f, t); w_t: (Dout, Kc) bf16;
    bias: (Dout, 1) f32.  Returns ((Dout, N) f32 conv output, delayed copy or None)."""
    Kc, N = patches.shape
    Dout = w_t.shape[0]

    n_pad = pl.cdiv(N, LANE) * LANE
    if n_pad != N:
        patches = jnp.pad(patches, ((0, 0), (0, n_pad - N)))

    tile_n = _pick_tile_n(n_pad)
    if delay > 0 and tile_n % t_len != 0:
        tile_n = n_pad               # keep (b, f) time-blocks aligned to tiles
    n_tiles = n_pad // tile_n

    with_delay = delay > 0
    if with_delay:
        kernel = partial(_embed_gemm_delay_kernel,
                         t_len=t_len, delay=delay, tile_n=tile_n)
        out_shape = (jax.ShapeDtypeStruct((Dout, n_pad), jnp.float32),
                     jax.ShapeDtypeStruct((Dout, n_pad), jnp.float32))
        out_specs = (pl.BlockSpec((Dout, tile_n), lambda j: (0, j)),
                     pl.BlockSpec((Dout, tile_n), lambda j: (0, j)))
    else:
        kernel = _embed_gemm_kernel
        out_shape = jax.ShapeDtypeStruct((Dout, n_pad), jnp.float32)
        out_specs = pl.BlockSpec((Dout, tile_n), lambda j: (0, j))

    n_out = 2 if with_delay else 1
    flops = 2 * Dout * Kc * n_pad
    bytes_accessed = (patches.size * 2 + w_t.size * 2 + bias.size * 4
                      + n_out * Dout * n_pad * 4)
    # double-buffered patch tile + output tiles + weights/bias, with headroom
    vmem_est = (2 * Kc * tile_n * 2 + 2 * n_out * Dout * tile_n * 4
                + Dout * Kc * 2 + Dout * LANE * 4)
    vmem_limit = int(min(96 * 1024 * 1024, max(16 * 1024 * 1024, 8 * vmem_est)))

    outs = pl.pallas_call(
        kernel,
        out_shape=out_shape,
        grid=(n_tiles,),
        in_specs=[
            pl.BlockSpec((Kc, tile_n), lambda j: (0, j)),    # lane-dense patches
            pl.BlockSpec((Dout, Kc), lambda j: (0, 0)),      # full weights
            pl.BlockSpec((Dout, 1), lambda j: (0, 0)),       # bias
        ],
        out_specs=out_specs,
        compiler_params=pltpu.CompilerParams(
            # independent N tiles; only engages v7x's 2nd TensorCore when there
            # are enough tiles (no-op on single-TC v5e/v6e, harmless for 1 tile).
            dimension_semantics=("parallel",),
            vmem_limit_bytes=vmem_limit,
            # allow XLA to fuse the im2col producer into the patches operand
            # instead of round-tripping the inflated slab through HBM.
            allow_input_fusion=[True, False, False],
        ),
        cost_estimate=pl.CostEstimate(
            flops=flops, transcendentals=0, bytes_accessed=bytes_accessed),
    )(patches, w_t, bias)

    if with_delay:
        out_flat, e_flat = outs
        return out_flat[:, :N], e_flat[:, :N]
    return outs[:, :N], None


# --------------------------- jitted forward glue ------------------------------

@partial(jax.jit, static_argnames=("delay",))
def _forward_impl(mixture, ctx_buf, w_t, bias, *, delay):
    B = mixture.shape[0]
    Din, F = ctx_buf.shape[1], ctx_buf.shape[2]
    Dout = w_t.shape[0]

    # TODO(synk): the big model (self.big) and bm_poison_idx NaN-poisoning are
    # undefined here; stand-in deterministically folds the mixture into the
    # (B, Din, F, T) 'embed' tensor the big model would emit.
    n_samples = mixture.shape[-1]
    assert n_samples % (Din * F) == 0, "stand-in reshape would drop samples"
    T = n_samples // (Din * F)
    embed = mixture.reshape(B, Din, F, T).astype(jnp.float32)

    # Embed_Causal: ctx concat along time, freq pad (1,1), Conv2d(Din, Dout, (3,3)).
    inp = jnp.concatenate([ctx_buf, embed], axis=-1)           # (B, Din, F, T+KW-1)
    new_ctx = inp[..., -(KW - 1):]
    inp = jnp.pad(inp, ((0, 0), (0, 0), (1, 1), (0, 0)))       # F.pad(input, (0,0,1,1))

    # im2col prologue in MXU-native (Kc, N) layout: Kc = KH*KW*Din on sublanes
    # (72 = 9*8, no lane padding), N = B*F*T lane-dense.  bf16 halves the bytes
    # of this memory-bound GEMM; accumulation stays f32 inside the kernel.
    cols = jnp.stack([inp[:, :, kh:kh + F, kw:kw + T]
                      for kh in range(KH) for kw in range(KW)], axis=0)  # (9,B,Din,F,T)
    patches = (cols.transpose(0, 2, 1, 3, 4)
                   .reshape(KH * KW * Din, B * F * T)
                   .astype(jnp.bfloat16))

    out_flat, e_flat = embed_causal_conv(patches, w_t, bias, t_len=T, delay=delay)
    embed_conv = out_flat.reshape(Dout, B, F, T).transpose(1, 0, 2, 3)  # NCHW
    if delay > 0:
        e = e_flat.reshape(Dout, B, F, T).transpose(1, 0, 2, 3)
    else:
        e = embed_conv            # roll(0) + empty zero-fill is the identity
    return embed, embed_conv, new_ctx, e


# --------------------------- pure-JAX reference -------------------------------
# Used ONLY for a one-time numerical check in __main__ (never in the forward path).

def _conv_reference(embed, ctx_buf, w4, bias):
    B, Din, F, T = embed.shape
    Dout = w4.shape[-1]
    inp = jnp.concatenate([ctx_buf, embed], axis=-1)
    inp = jnp.pad(inp, ((0, 0), (0, 0), (1, 1), (0, 0)))
    x = jnp.transpose(inp, (0, 2, 3, 1))                       # (B, F+2, T+KW-1, Din)
    out = jnp.broadcast_to(bias.reshape(1, Dout, 1, 1), (B, Dout, F, T))
    for kh in range(KH):
        for kw in range(KW):
            out = out + jnp.einsum('bfti,io->boft',
                                   x[:, kh:kh + F, kw:kw + T, :], w4[kh, kw],
                                   precision=jax.lax.Precision.HIGHEST)
    return out


# ----------------------------- JointModel glue -------------------------------

class JointModelPallas:
    """JAX/Pallas port of JointModel's defined compute (Embed_Causal + delay)."""

    def __init__(self, key, n_srcs=4, nfreqs=16, compression=1, delay=0):
        self.K = KW
        self.embed_dim = n_srcs * 2                      # big.tfgridnet.n_srcs * 2
        self.compression_dim = self.embed_dim // compression
        self.nfreqs = nfreqs                             # small.tfgridnet.n_freqs
        self.delay = delay

        # Conv2d(embed_dim, compression_dim, kernel_size=(3, K)); stored natively
        # as (KH, KW, Din, Dout), pre-flattened ONCE to bf16 (Dout, KH*KW*Din).
        fan_in = self.embed_dim * KH * KW
        bound = 1.0 / math.sqrt(fan_in)
        kw_key, kb_key = jax.random.split(key)
        self.w4 = jax.random.uniform(
            kw_key, (KH, KW, self.embed_dim, self.compression_dim),
            minval=-bound, maxval=bound, dtype=jnp.float32)
        self.w_t = jnp.asarray(
            self.w4.reshape(KH * KW * self.embed_dim, self.compression_dim).T
        ).astype(jnp.bfloat16)
        self.b = jax.random.uniform(
            kb_key, (self.compression_dim, 1),
            minval=-bound, maxval=bound, dtype=jnp.float32)

    def init_buffers(self, batch):
        # TODO(synk): 'lm_bufs' / 'sm_bufs' belong to the undefined big/small TFGridNet models.
        return {'emb_bufs': {'ctx_buf': jnp.zeros(
            (batch, self.embed_dim, self.nfreqs, self.K - 1), jnp.float32)}}

    def __call__(self, inputs, current_state=None):
        x = inputs['mixture']
        if current_state is None:
            current_state = self.init_buffers(x.shape[0])
        ctx = current_state['emb_bufs']['ctx_buf']

        embed, embed_conv, new_ctx, e = _forward_impl(
            x, ctx, self.w_t, self.b, delay=self.delay)

        current_state['emb_bufs'] = {'ctx_buf': new_ctx}
        out_b = {'embed': embed, 'embed_conv': embed_conv, 'next_state': current_state}
        # TODO(synk): the small model (self.small) forward is undefined; out_s carries
        # the delayed embedding it would consume plus its (unmodified) state.
        out_s = {'embed_in': e, 'next_state': current_state}
        return out_b, out_s


# --------------------------------- main --------------------------------------

if __name__ == "__main__":
    key = jax.random.PRNGKey(0)
    k_model, k_data = jax.random.split(key)

    B, n_srcs, nfreqs, T = 2, 4, 16, 8          # embed_dim = 8, compression_dim = 8
    model = JointModelPallas(k_model, n_srcs=n_srcs, nfreqs=nfreqs,
                             compression=1, delay=0)

    n_samples = model.embed_dim * nfreqs * T     # so the stand-in reshape is exact
    mixture = jax.random.normal(k_data, (B, 1, n_samples), dtype=jnp.float32)

    out_b, out_s = model({'mixture': mixture})
    jax.block_until_ready((out_b['embed_conv'], out_s['embed_in']))

    assert out_b['embed_conv'].shape == (B, model.compression_dim, nfreqs, T)
    assert out_s['embed_in'].shape == (B, model.compression_dim, nfreqs, T)
    assert out_b['next_state']['emb_bufs']['ctx_buf'].shape == (B, model.embed_dim, nfreqs, 2)

    # One-time numerical check (outside the jitted forward path).  The kernel
    # uses bf16 patches/weights with f32 accumulation, so the reference uses
    # bf16-rounded inputs with exact (f32) products.
    zero_ctx = jnp.zeros((B, model.embed_dim, nfreqs, model.K - 1), jnp.float32)
    w4_bf = model.w4.astype(jnp.bfloat16).astype(jnp.float32)
    embed_bf = out_b['embed'].astype(jnp.bfloat16).astype(jnp.float32)
    ref = _conv_reference(embed_bf, zero_ctx, w4_bf, model.b)
    assert jnp.allclose(out_b['embed_conv'], ref, atol=1e-2, rtol=1e-2), "conv mismatch"

    # Exercise + check the fused delay (roll + zero-fill) epilogue path.
    delay = 3
    model_d = JointModelPallas(k_model, n_srcs=n_srcs, nfreqs=nfreqs,
                               compression=1, delay=delay)
    out_b_d, out_s_d = model_d({'mixture': mixture})
    jax.block_until_ready(out_s_d['embed_in'])
    ref_e = jnp.roll(out_b_d['embed_conv'], delay, axis=3).at[..., :delay].set(0.0)
    assert jnp.allclose(out_s_d['embed_in'], ref_e, atol=1e-5, rtol=1e-5), "delay mismatch"

    print("KERNEL_OK")
</pallas_src>

<mosaic_0001>
module attributes {stable_mosaic.version = 11 : i64} {
  func.func @_embed_gemm_kernel(%arg0: i32, %arg1: memref<72x256xbf16, #tpu.memory_space<vmem>>, %arg2: memref<8x72xbf16, #tpu.memory_space<vmem>>, %arg3: memref<8x1xf32, #tpu.memory_space<vmem>>, %arg4: memref<8x256xf32, #tpu.memory_space<vmem>>) attributes {dimension_semantics = [#tpu.dimension_semantics<parallel>], iteration_bounds = array<i64: 1>, scalar_prefetch = 0 : i64, scratch_operands = 0 : i64, tpu.core_type = #tpu.core_type<tc>, window_params = [{transform_indices = @transform_0, window_bounds = array<i64: 72, 256>}, {pipeline_mode = #tpu.pipeline_mode<synchronous>, transform_indices = @transform_1, window_bounds = array<i64: 8, 72>}, {pipeline_mode = #tpu.pipeline_mode<synchronous>, transform_indices = @transform_2, window_bounds = array<i64: 8, 1>}, {transform_indices = @transform_3, window_bounds = array<i64: 8, 256>}]} {
    %c0 = arith.constant 0 : index
    %c0_0 = arith.constant 0 : index
    %0 = vector.load %arg2[%c0, %c0_0] : memref<8x72xbf16, #tpu.memory_space<vmem>>, vector<8x72xbf16>
    %c0_1 = arith.constant 0 : index
    %c0_2 = arith.constant 0 : index
    %1 = vector.load %arg1[%c0_1, %c0_2] : memref<72x256xbf16, #tpu.memory_space<vmem>>, vector<72x256xbf16>
    %cst = arith.constant dense<0.000000e+00> : vector<8x256xf32>
    %2 = tpu.matmul %0, %1, %cst {dimension_numbers = #tpu.dot_dimension_numbers<[1], [0], [0], [1], [0, 0, 1, 1], [], []>} : vector<8x72xbf16>, vector<72x256xbf16>, vector<8x256xf32> -> vector<8x256xf32>
    %c0_3 = arith.constant 0 : index
    %c0_4 = arith.constant 0 : index
    %3 = vector.load %arg3[%c0_3, %c0_4] : memref<8x1xf32, #tpu.memory_space<vmem>>, vector<8x1xf32>
    %4 = vector.broadcast %3 : vector<8x1xf32> to vector<8x256xf32>
    %5 = arith.addf %2, %4 : vector<8x256xf32>
    %c0_5 = arith.constant 0 : index
    %c0_6 = arith.constant 0 : index
    %6 = vector.load %arg4[%c0_5, %c0_6] : memref<8x256xf32, #tpu.memory_space<vmem>>, vector<8x256xf32>
    tpu.vector_store %arg4[%c0_5, %c0_6], %5 {strides = array<i32>} : memref<8x256xf32, #tpu.memory_space<vmem>>, vector<8x256xf32>,
    return
  }
  func.func @transform_0(%arg0: i32) -> (i32, i32) {
    %c0_i32 = arith.constant 0 : i32
    %c0_i32_0 = arith.constant 0 : i32
    return %c0_i32, %arg0 : i32, i32
  }
  func.func @transform_1(%arg0: i32) -> (i32, i32) {
    %c0_i32 = arith.constant 0 : i32
    %c0_i32_0 = arith.constant 0 : i32
    %c0_i32_1 = arith.constant 0 : i32
    return %c0_i32, %c0_i32_0 : i32, i32
  }
  func.func @transform_2(%arg0: i32) -> (i32, i32) {
    %c0_i32 = arith.constant 0 : i32
    %c0_i32_0 = arith.constant 0 : i32
    %c0_i32_1 = arith.constant 0 : i32
    return %c0_i32, %c0_i32_0 : i32, i32
  }
  func.func @transform_3(%arg0: i32) -> (i32, i32) {
    %c0_i32 = arith.constant 0 : i32
    %c0_i32_0 = arith.constant 0 : i32
    return %c0_i32, %arg0 : i32, i32
  }
}

</mosaic_0001>

<llo_original>
// kernel: _forward_impl.1
$region0: #{_forward_impl.1}
  #allocation0 [shape = 'u32[]', space=smem, size = 0x4, offset = 0x4, fixed_abs, tag = 'smem constant byte address 0x4 - core index']
  #allocation1 [shape = 'u32[144,128]{1,0:T(1,128)}', space=vmem, size = 0x12000, scoped, tag = 'internal scratch']
  %s0 = inlined_call_operand.vmem [shape: bf16[72,256], index: 0, kind: input, shape index: {}]
  %s1 = inlined_call_operand.vmem [shape: bf16[8,72], index: 1, kind: input, shape index: {}]
  %s2 = inlined_call_operand.vmem [shape: f32[8,1], index: 2, kind: input, shape index: {}]
  %s3 = inlined_call_operand.vmem [shape: f32[8,256], index: 3, kind: output, shape index: {}]
  %s4 = sld [smem:[#allocation0]]
  $region22: #{_forward_impl.1} parent=0
    _
  %s6 = ssub.s32 1, %s4
  %s7 = scalar_select 0, %s6, %s4
  // Predicated region
  $region2: #{_forward_impl.1} parent=0 // pred_check
    _
  $region3: #{_forward_impl.1} parent=0 // pred_check_branch
    %9 = sbr.rel (0) target = $region5
  $region4: #{_forward_impl.1} parent=0 // pred_region
    _
  $region5: #{_forward_impl.1} parent=0 // pred_fallthru
    _
  // Predicated region
  $region6: #{_forward_impl.1} parent=0 // pred_check
    _
  $region7: #{_forward_impl.1} parent=0 // pred_check_branch
    %11 = sbr.rel (0) target = $region9
  $region8: #{_forward_impl.1} parent=0 // pred_region
    _
  $region9: #{_forward_impl.1} parent=0 // pred_fallthru
    _
  // Predicated region
  $region10: #{_forward_impl.1} parent=0 // pred_check
    _
  $region11: #{_forward_impl.1} parent=0 // pred_check_branch
    %13 = sbr.rel (0) target = $region13
  $region12: #{_forward_impl.1} parent=0 // pred_region
    _
  $region13: #{_forward_impl.1} parent=0 // pred_fallthru
    _
  %v15 = vld [vmem:[%s1] sm:$0xf]
  %v16 = vld [vmem:[%s0] sm:$0xff]
  %v17 = vld [vmem:[%s0 + $0x8] sm:$0xff]
  %v18 = vld [vmem:[%s0 + $0x10] sm:$0xff]
  %v19 = vld [vmem:[%s0 + $0x18] sm:$0xff]
  %v20 = vld [vmem:[%s0 + $0x20] sm:$0xff]
  %v21 = vld [vmem:[%s0 + $0x28] sm:$0xff]
  %v22 = vld [vmem:[%s0 + $0x30] sm:$0xff]
  %v23 = vld [vmem:[%s0 + $0x38] sm:$0xff]
  %v24 = vld [vmem:[%s0 + $0x40] sm:$0xff]
  %v25 = vld [vmem:[%s2] sm:$0xff]
  %27 = vset.pattern.permute.xlu0 0
  %28 = vperm.xlu0 %27, %v25
  %v29 = vpop.permute.xlu0 %28
  %v40 = vunpack.c.l.b16 %v16
  %v41 = vunpack.c.h.b16 %v16
  %v42 = vunpack.c.l.b16 %v17
  %v43 = vunpack.c.h.b16 %v17
  %v44 = vunpack.c.l.b16 %v18
  %v45 = vunpack.c.h.b16 %v18
  %v46 = vunpack.c.l.b16 %v19
  %v47 = vunpack.c.h.b16 %v19
  %v48 = vunpack.c.l.b16 %v20
  %v49 = vunpack.c.h.b16 %v20
  %v50 = vunpack.c.l.b16 %v21
  %v51 = vunpack.c.h.b16 %v21
  %v52 = vunpack.c.l.b16 %v22
  %v53 = vunpack.c.h.b16 %v22
  %v54 = vunpack.c.l.b16 %v23
  %v55 = vunpack.c.h.b16 %v23
  %v56 = vunpack.c.l.b16 %v24
  %v57 = vunpack.c.h.b16 %v24
  %v58 = vpack.c.b16 %v42, %v40
  %v59 = vpack.c.b16 %v43, %v41
  %v60 = vpack.c.b16 %v46, %v44
  %v61 = vpack.c.b16 %v47, %v45
  %v62 = vpack.c.b16 %v50, %v48
  %v63 = vpack.c.b16 %v51, %v49
  %v64 = vpack.c.b16 %v54, %v52
  %v65 = vpack.c.b16 %v55, %v53
  %v66 = vpack.c.b16 %v56, %v56
  %v67 = vpack.c.b16 %v57, %v57
  %vm76 = vcmask 588800
  %v78 = vsel %vm76, %v15, 0
  %vm80 = vcmask 1043456
  %v82 = vsel %vm80, %v66, 0
  %v85 = vsel %vm80, %v67, 0
  %87 = vmatprep.subr.bf16.mxu0 0
  %88 = vmatpush1.bf16.msra.mxu0 0
  %89 = vmatprep.subr.bf16.mxu0 0
  %90 = vmatpush1.bf16.msra.mxu0 0
  %91 = vmatprep.subr.bf16.mxu0 0
  %92 = vmatpush1.bf16.msra.mxu0 0
  %93 = vmatprep.subr.bf16.mxu0 %v85
  %94 = vmatpush1.bf16.msra.mxu0 %v82
  %95 = vmatprep.subr.bf16.mxu0 %v65
  %96 = vmatpush1.bf16.msra.mxu0 %v64
  %97 = vmatprep.subr.bf16.mxu0 %v63
  %98 = vmatpush1.bf16.msra.mxu0 %v62
  %99 = vmatprep.subr.bf16.mxu0 %v61
  %100 = vmatpush1.bf16.msra.mxu0 %v60
  %101 = vmatprep.subr.bf16.mxu0 %v59
  %102 = vmatpush1.bf16.msra.mxu0 %v58
  %103 = vmatprep.subr.bf16.mxu0 0
  %104 = vmatpush2.bf16.msra.mxu0 0
  %105 = vmatprep.subr.bf16.mxu0 0
  %106 = vmatpush2.bf16.msra.mxu0 0
  %107 = vmatprep.subr.bf16.mxu0 0
  %108 = vmatpush2.bf16.msra.mxu0 0
  %109 = vmatprep.subr.bf16.mxu0 0
  %110 = vmatpush2.bf16.msra.mxu0 0
  %111 = vmatprep.subr.bf16.mxu0 0
  %112 = vmatpush2.bf16.msra.mxu0 0
  %113 = vmatprep.subr.bf16.mxu0 0
  %114 = vmatpush2.bf16.msra.mxu0 0
  %115 = vmatprep.subr.bf16.mxu0 0
  %116 = vmatpush2.bf16.msra.mxu0 0
  %117 = vmatprep.subr.bf16.mxu0 0
  %118 = vmatpush2.bf16.msra.mxu0 0
  %119 = vmatprep.mubr.bf16.mxu0 0
  %120 = vmatmul.mubr.bf16.gmra.mxu0 %v78
  %v121 = vpop.f32.mrf.mxu0
  %v122 = vadd.f32 %v29, %v121
  %v123 = vpop.f32.mrf.mxu0
  %v124 = vadd.f32 %v29, %v123
  %v125 = vpop.f32.mrf.mxu0
  %v126 = vpop.f32.mrf.mxu0
  %127 = vdwg.mxu0
  %128 = vst [vmem:[%s3] sm:$0xff] %v122
  %129 = vst [vmem:[%s3 + $0x8] sm:$0xff] %v124
  // Predicated region
  $region14: #{_forward_impl.1} parent=0 // pred_check
    _
  $region15: #{_forward_impl.1} parent=0 // pred_check_branch
    %131 = sbr.rel (0) target = $region17
  $region16: #{_forward_impl.1} parent=0 // pred_region
    _
  $region17: #{_forward_impl.1} parent=0 // pred_fallthru
    _
  // Predicated region
  $region18: #{_forward_impl.1} parent=0 // pred_check
    _
  $region19: #{_forward_impl.1} parent=0 // pred_check_branch
    %133 = sbr.rel (0) target = $region21
  $region20: #{_forward_impl.1} parent=0 // pred_region
    _
  $region21: #{_forward_impl.1} parent=0 // pred_fallthru
    _

</llo_original>
